<compile_context>
chip_gen: v5e
topology: v5e:2x2
jax: 0.10.0
libtpu: 0.0.40
codegen_flags: <defaults>
</compile_context>

<pallas_src>
import functools

import jax
import jax.numpy as jnp
from jax.experimental import pallas as pl
from jax.experimental.pallas import tpu as pltpu

_NEG_INF = -1e30
_BN_EPS = 1e-5


def _round_up(x, m):
  return (x + m - 1) // m * m


def _choose_padding_and_tiles(n):
  """Padded node count and (tq, tk) attention tile sizes."""
  if n <= 1024:
    npad = _round_up(max(n, 8), 8)
    return npad, npad, npad          # single block per axis
  npad = _round_up(n, 512)
  return npad, 512, 512              # budget-safe on 64 MiB (v7x) VMEM


# ----------------------------------------------------------------------------
# Kernels
# ----------------------------------------------------------------------------
def _project_kernel(x_ref, w_ref, att_ref, xp_ref, sc_ref):
  """xp = x @ W (bf16 -> f32 acc); scores = xp @ att_packed ([dst | src])."""
  xp = jnp.dot(x_ref[...], w_ref[...], preferred_element_type=jnp.float32)
  xp_ref[...] = xp.astype(xp_ref.dtype)
  sc_ref[...] = jnp.dot(xp.astype(jnp.bfloat16), att_ref[...],
                        preferred_element_type=jnp.float32)


def _gat_attn_kernel(dst_ref, srcT_ref, xp_ref, mask_ref, b_ref, o_ref,
                     m_ref, l_ref, acc_ref, *, heads, cph, apply_relu):
  """Flash-style GAT attention over one (q-block, k-block) grid step."""
  ki = pl.program_id(1)

  @pl.when(ki == 0)
  def _():
    m_ref[...] = jnp.full_like(m_ref, -jnp.inf)
    l_ref[...] = jnp.zeros_like(l_ref)
    acc_ref[...] = jnp.zeros_like(acc_ref)

  mask = mask_ref[...].astype(jnp.float32)        # [tq, tk] additive 0/-1e30
  xv = xp_ref[...]                                # [tk, H*C] bf16

  for h in range(heads):                          # static unroll, H is small
    sl = slice(h * cph, (h + 1) * cph)
    e = dst_ref[:, h:h + 1] + srcT_ref[h:h + 1, :]          # [tq, tk]
    e = jnp.maximum(e, 0.2 * e)                             # LeakyReLU(0.2)
    e = e + mask                                            # mask non-edges
    m_prev = m_ref[:, h:h + 1]
    m_new = jnp.maximum(m_prev, jnp.max(e, axis=-1, keepdims=True))
    alpha = jnp.exp(m_prev - m_new)
    p = jnp.exp(e - m_new)          # non-edges underflow to exactly 0
    l_ref[:, h:h + 1] = alpha * l_ref[:, h:h + 1] + jnp.sum(
        p, axis=-1, keepdims=True)
    acc_ref[:, sl] = alpha * acc_ref[:, sl] + jnp.dot(
        p.astype(jnp.bfloat16), xv[:, sl], preferred_element_type=jnp.float32)
    m_ref[:, h:h + 1] = m_new

  @pl.when(ki == pl.num_programs(1) - 1)
  def _():
    inv = pl.reciprocal(l_ref[...], approx=True)            # [tq, H]
    parts = [acc_ref[:, h * cph:(h + 1) * cph] * inv[:, h:h + 1]
             for h in range(heads)]
    y = jnp.concatenate(parts, axis=-1) + b_ref[...]        # [tq, H*C]
    if apply_relu:
      y = jnp.maximum(y, 0.0)
    o_ref[...] = y                                          # one dense store


def _bn_kernel(x_ref, valid_ref, g_ref, b_ref, o_ref, *, inv_n, eps):
  """BatchNorm1d (train-mode batch stats) on a column block; rows masked."""
  v = valid_ref[...]                              # [NP, 1] 1=real node, 0=pad
  x = x_ref[...]
  mean = jnp.sum(x * v, axis=0, keepdims=True) * inv_n
  xc = x - mean
  var = jnp.sum(xc * xc * v, axis=0, keepdims=True) * inv_n
  inv = jax.lax.rsqrt(var + eps)
  o_ref[...] = (xc * inv * g_ref[...] + b_ref[...]).astype(o_ref.dtype)


def _linear_pool_kernel(x_ref, w_ref, b_ref, oneh_ref, o_ref, *, g_pad):
  """y = x @ W + b on a row block, then running global max pool per graph."""
  @pl.when(pl.program_id(0) == 0)
  def _():
    o_ref[...] = jnp.full_like(o_ref, _NEG_INF)

  y = jnp.dot(x_ref[...], w_ref[...], preferred_element_type=jnp.float32)
  y = y + b_ref[...]
  rows = []
  for g in range(g_pad):                          # static, small graph count
    m = oneh_ref[:, g:g + 1]                      # [tr, 1]
    rows.append(jnp.max(jnp.where(m > 0, y, _NEG_INF), axis=0))
  o_ref[...] = jnp.maximum(o_ref[...], jnp.stack(rows, axis=0))


# ----------------------------------------------------------------------------
# Pallas wrappers
# ----------------------------------------------------------------------------
def _gat_project(x_bf16, w, att_src, att_dst, *, tr):
  npad, fin = x_bf16.shape
  hc = w.shape[1]
  heads = att_src.shape[0]
  # Block-diagonal packed attention matrix: scores = xp @ att_packed,
  # scores[:, :H] = per-head dst scores, scores[:, H:] = per-head src scores.
  eye = jnp.eye(heads, dtype=jnp.float32)
  dst_blk = (att_dst[:, :, None] * eye[:, None, :]).reshape(hc, heads)
  src_blk = (att_src[:, :, None] * eye[:, None, :]).reshape(hc, heads)
  att_packed = jnp.concatenate([dst_blk, src_blk], axis=1).astype(jnp.bfloat16)

  xp, scores = pl.pallas_call(
      _project_kernel,
      grid=(npad // tr,),
      in_specs=[
          pl.BlockSpec((tr, fin), lambda i: (i, 0)),
          pl.BlockSpec((fin, hc), lambda i: (0, 0)),
          pl.BlockSpec((hc, 2 * heads), lambda i: (0, 0)),
      ],
      out_specs=[
          pl.BlockSpec((tr, hc), lambda i: (i, 0)),
          pl.BlockSpec((tr, 2 * heads), lambda i: (i, 0)),
      ],
      out_shape=[
          jax.ShapeDtypeStruct((npad, hc), jnp.bfloat16),
          jax.ShapeDtypeStruct((npad, 2 * heads), jnp.float32),
      ],
      compiler_params=pltpu.CompilerParams(dimension_semantics=("parallel",)),
  )(x_bf16, w.astype(jnp.bfloat16), att_packed)
  return xp, scores


def _gat_attention(dst, srcT, xp, adj_bias, bias, *, heads, cph, tq, tk,
                   apply_relu):
  npad = xp.shape[0]
  hc = heads * cph
  grid = (npad // tq, npad // tk)
  kernel = functools.partial(_gat_attn_kernel, heads=heads, cph=cph,
                             apply_relu=apply_relu)
  cost = pl.CostEstimate(
      flops=int(2 * heads * npad * npad * cph + 10 * heads * npad * npad),
      transcendentals=int(heads * npad * npad),
      bytes_accessed=int(npad * npad * 2 + grid[0] * npad * hc * 2
                         + npad * hc * 4),
  )
  return pl.pallas_call(
      kernel,
      grid=grid,
      in_specs=[
          pl.BlockSpec((tq, heads), lambda qi, ki: (qi, 0)),   # dst scores
          pl.BlockSpec((heads, tk), lambda qi, ki: (0, ki)),   # src scores^T
          pl.BlockSpec((tk, hc), lambda qi, ki: (ki, 0)),      # xp (values)
          pl.BlockSpec((tq, tk), lambda qi, ki: (qi, ki)),     # additive mask
          pl.BlockSpec((1, hc), lambda qi, ki: (0, 0)),        # conv bias
      ],
      out_specs=pl.BlockSpec((tq, hc), lambda qi, ki: (qi, 0)),
      out_shape=jax.ShapeDtypeStruct((npad, hc), jnp.float32),
      scratch_shapes=[
          pltpu.VMEM((tq, heads), jnp.float32),   # running max  m
          pltpu.VMEM((tq, heads), jnp.float32),   # running sum  l
          pltpu.VMEM((tq, hc), jnp.float32),      # accumulator
      ],
      compiler_params=pltpu.CompilerParams(
          dimension_semantics=("parallel", "arbitrary")),
      cost_estimate=cost,
  )(dst, srcT, xp, adj_bias, bias.reshape(1, hc))


def gat_layer(x_bf16, adj_bias, w, att_src, att_dst, bias, *, tq, tk,
              apply_relu=True):
  """Dense GATConv (concat heads, +bias), optional fused ReLU epilogue."""
  heads, cph = att_src.shape
  xp, scores = _gat_project(x_bf16, w, att_src, att_dst, tr=tq)
  dst = scores[:, :heads]
  srcT = scores[:, heads:].T                      # one transpose, in XLA
  return _gat_attention(dst, srcT, xp, adj_bias, bias, heads=heads, cph=cph,
                        tq=tq, tk=tk, apply_relu=apply_relu)


def batchnorm(x, valid, gamma, beta, n_valid, *, out_dtype=jnp.bfloat16):
  """BatchNorm1d with batch statistics over valid rows; feature-tiled grid."""
  npad, f = x.shape
  tf = 128 if f % 128 == 0 else f
  kernel = functools.partial(_bn_kernel, inv_n=1.0 / n_valid, eps=_BN_EPS)
  return pl.pallas_call(
      kernel,
      grid=(f // tf,),
      in_specs=[
          pl.BlockSpec((npad, tf), lambda j: (0, j)),
          pl.BlockSpec((npad, 1), lambda j: (0, 0)),
          pl.BlockSpec((1, tf), lambda j: (0, j)),
          pl.BlockSpec((1, tf), lambda j: (0, j)),
      ],
      out_specs=pl.BlockSpec((npad, tf), lambda j: (0, j)),
      out_shape=jax.ShapeDtypeStruct((npad, f), out_dtype),
      compiler_params=pltpu.CompilerParams(dimension_semantics=("parallel",)),
  )(x, valid, gamma.reshape(1, f), beta.reshape(1, f))


def linear_global_max_pool(x, w_pad, b_pad, onehot_t, *, tr):
  """Linear (lane-padded to 128 out cols) + global max pool over graphs."""
  npad, fin = x.shape
  g_pad = onehot_t.shape[1]
  cpad = w_pad.shape[1]
  kernel = functools.partial(_linear_pool_kernel, g_pad=g_pad)
  return pl.pallas_call(
      kernel,
      grid=(npad // tr,),
      in_specs=[
          pl.BlockSpec((tr, fin), lambda i: (i, 0)),
          pl.BlockSpec((fin, cpad), lambda i: (0, 0)),
          pl.BlockSpec((1, cpad), lambda i: (0, 0)),
          pl.BlockSpec((tr, g_pad), lambda i: (i, 0)),
      ],
      out_specs=pl.BlockSpec((g_pad, cpad), lambda i: (0, 0)),
      out_shape=jax.ShapeDtypeStruct((g_pad, cpad), jnp.float32),
      compiler_params=pltpu.CompilerParams(dimension_semantics=("arbitrary",)),
  )(x, w_pad, b_pad, onehot_t)


# ----------------------------------------------------------------------------
# GATNet: parameter init + forward
# ----------------------------------------------------------------------------
def _xavier_uniform(key, shape):
  fan_in, fan_out = shape[0], shape[1]
  limit = (6.0 / (fan_in + fan_out)) ** 0.5
  return jax.random.uniform(key, shape, jnp.float32, -limit, limit)


def init_gatnet_params(key, in_channels, out_channels, heads):
  ks = jax.random.split(key, 8)
  hid = 128                         # conv1 per-head width (as in the module)
  return {
      # GATConv 1: in_channels -> 128 per head, concat -> 128*heads
      "conv1_w": _xavier_uniform(ks[0], (in_channels, heads * hid)),
      "conv1_att_src": _xavier_uniform(ks[1], (heads, hid)),
      "conv1_att_dst": _xavier_uniform(ks[2], (heads, hid)),
      "conv1_bias": jnp.zeros((heads * hid,), jnp.float32),
      # BatchNorm1d(128*heads)
      "bn1_gamma": jnp.ones((heads * hid,), jnp.float32),
      "bn1_beta": jnp.zeros((heads * hid,), jnp.float32),
      # GATConv 2: 128*heads -> out_channels per head, concat
      "conv2_w": _xavier_uniform(ks[3], (heads * hid, heads * out_channels)),
      "conv2_att_src": _xavier_uniform(ks[4], (heads, out_channels)),
      "conv2_att_dst": _xavier_uniform(ks[5], (heads, out_channels)),
      "conv2_bias": jnp.zeros((heads * out_channels,), jnp.float32),
      # BatchNorm1d(out_channels*heads)
      "bn2_gamma": jnp.ones((heads * out_channels,), jnp.float32),
      "bn2_beta": jnp.zeros((heads * out_channels,), jnp.float32),
      # gcn_linear: out_channels*heads -> out_channels  (stored [in, out])
      "lin_w": _xavier_uniform(ks[6], (heads * out_channels, out_channels)),
      "lin_b": jnp.zeros((out_channels,), jnp.float32),
  }


def gatnet_forward(params, input_feature, input_adj, ibatch, num_graphs):
  n = input_feature.shape[0]
  npad, tq, tk = _choose_padding_and_tiles(n)
  pad = npad - n

  # Pad the node axis once; padded rows/cols are masked everywhere downstream.
  x = input_feature.astype(jnp.bfloat16)
  adj = input_adj
  if pad:
    x = jnp.pad(x, ((0, pad), (0, 0)))
    adj = jnp.pad(adj, ((0, pad), (0, pad)))
  # GATConv(add_self_loops=True): every (also padded) node attends to itself.
  # This keeps every softmax denominator > 0, so padded rows stay finite.
  adj = jnp.maximum(adj, jnp.eye(npad, dtype=adj.dtype))
  # Adjacency as a single additive bf16 bias (0 for edges, -1e30 otherwise).
  adj_bias = jnp.where(adj > 0, 0.0, _NEG_INF).astype(jnp.bfloat16)
  valid = (jnp.arange(npad) < n).astype(jnp.float32)[:, None]

  # conv1 -> ReLU (fused) -> BatchNorm1d
  feat = gat_layer(x, adj_bias, params["conv1_w"], params["conv1_att_src"],
                   params["conv1_att_dst"], params["conv1_bias"],
                   tq=tq, tk=tk, apply_relu=True)
  feat = batchnorm(feat, valid, params["bn1_gamma"], params["bn1_beta"], n)

  # conv2 -> ReLU (fused) -> BatchNorm1d
  feat = gat_layer(feat, adj_bias, params["conv2_w"], params["conv2_att_src"],
                   params["conv2_att_dst"], params["conv2_bias"],
                   tq=tq, tk=tk, apply_relu=True)
  feat = batchnorm(feat, valid, params["bn2_gamma"], params["bn2_beta"], n)

  # gcn_linear -> global max pool (lane-padded output, sliced here).
  g_pad = _round_up(num_graphs, 8)
  onehot_t = (ibatch[:, None] == jnp.arange(num_graphs)[None, :]).astype(
      jnp.float32)                                            # [N, G]
  onehot_t = jnp.pad(onehot_t, ((0, pad), (0, g_pad - num_graphs)))
  c_out = params["lin_w"].shape[1]
  c_pad = _round_up(c_out, 128)
  w_pad = jnp.pad(params["lin_w"],
                  ((0, 0), (0, c_pad - c_out))).astype(jnp.bfloat16)
  b_pad = jnp.pad(params["lin_b"], (0, c_pad - c_out)).reshape(1, c_pad)
  pooled = linear_global_max_pool(feat, w_pad, b_pad, onehot_t, tr=tq)
  return pooled[:num_graphs, :c_out]


# ----------------------------------------------------------------------------
if __name__ == "__main__":
  in_channels = 16
  out_channels = 16
  heads = 2
  n_nodes = 16
  num_graphs = 2

  key = jax.random.PRNGKey(0)
  k_param, k_feat, k_a0, k_a1 = jax.random.split(key, 4)

  params = init_gatnet_params(k_param, in_channels, out_channels, heads)

  # Node features.
  input_feature = jax.random.normal(k_feat, (n_nodes, in_channels),
                                    dtype=jnp.float32)

  # Block-diagonal symmetric adjacency (2 graphs of 8 nodes) + self loops.
  half = n_nodes // num_graphs
  a0 = (jax.random.uniform(k_a0, (half, half)) < 0.4).astype(jnp.float32)
  a1 = (jax.random.uniform(k_a1, (half, half)) < 0.4).astype(jnp.float32)
  a0 = jnp.maximum(a0, a0.T)
  a1 = jnp.maximum(a1, a1.T)
  input_adj = jnp.zeros((n_nodes, n_nodes), jnp.float32)
  input_adj = input_adj.at[:half, :half].set(a0)
  input_adj = input_adj.at[half:, half:].set(a1)
  input_adj = jnp.maximum(input_adj, jnp.eye(n_nodes, dtype=jnp.float32))

  ibatch = jnp.concatenate([
      jnp.zeros((half,), jnp.int32),
      jnp.ones((half,), jnp.int32),
  ])

  out = gatnet_forward(params, input_feature, input_adj, ibatch, num_graphs)
  out = jax.block_until_ready(out)
  assert out.shape == (num_graphs, out_channels), out.shape
  assert bool(jnp.all(jnp.isfinite(out)))
  print("KERNEL_OK")
</pallas_src>

<mosaic_0001>
module attributes {stable_mosaic.version = 11 : i64} {
  func.func @_project_kernel(%arg0: i32, %arg1: memref<16x16xbf16, #tpu.memory_space<vmem>>, %arg2: memref<16x256xbf16, #tpu.memory_space<vmem>>, %arg3: memref<256x4xbf16, #tpu.memory_space<vmem>>, %arg4: memref<16x256xbf16, #tpu.memory_space<vmem>>, %arg5: memref<16x4xf32, #tpu.memory_space<vmem>>) attributes {dimension_semantics = [#tpu.dimension_semantics<parallel>], iteration_bounds = array<i64: 1>, scalar_prefetch = 0 : i64, scratch_operands = 0 : i64, tpu.core_type = #tpu.core_type<tc>, window_params = [{transform_indices = @transform_0, window_bounds = array<i64: 16, 16>}, {pipeline_mode = #tpu.pipeline_mode<synchronous>, transform_indices = @transform_1, window_bounds = array<i64: 16, 256>}, {pipeline_mode = #tpu.pipeline_mode<synchronous>, transform_indices = @transform_2, window_bounds = array<i64: 256, 4>}, {transform_indices = @transform_3, window_bounds = array<i64: 16, 256>}, {transform_indices = @transform_4, window_bounds = array<i64: 16, 4>}]} {
    %c0 = arith.constant 0 : index
    %c0_0 = arith.constant 0 : index
    %0 = vector.load %arg1[%c0, %c0_0] : memref<16x16xbf16, #tpu.memory_space<vmem>>, vector<16x16xbf16>
    %c0_1 = arith.constant 0 : index
    %c0_2 = arith.constant 0 : index
    %1 = vector.load %arg2[%c0_1, %c0_2] : memref<16x256xbf16, #tpu.memory_space<vmem>>, vector<16x256xbf16>
    %cst = arith.constant dense<0.000000e+00> : vector<16x256xf32>
    %2 = tpu.matmul %0, %1, %cst {dimension_numbers = #tpu.dot_dimension_numbers<[1], [0], [0], [1], [0, 0, 1, 1], [], []>} : vector<16x16xbf16>, vector<16x256xbf16>, vector<16x256xf32> -> vector<16x256xf32>
    %3 = arith.truncf %2 : vector<16x256xf32> to vector<16x256xbf16>
    %c0_3 = arith.constant 0 : index
    %c0_4 = arith.constant 0 : index
    %4 = vector.load %arg4[%c0_3, %c0_4] : memref<16x256xbf16, #tpu.memory_space<vmem>>, vector<16x256xbf16>
    tpu.vector_store %arg4[%c0_3, %c0_4], %3 {strides = array<i32>} : memref<16x256xbf16, #tpu.memory_space<vmem>>, vector<16x256xbf16>,
    %5 = arith.truncf %2 : vector<16x256xf32> to vector<16x256xbf16>
    %c0_5 = arith.constant 0 : index
    %c0_6 = arith.constant 0 : index
    %6 = vector.load %arg3[%c0_5, %c0_6] : memref<256x4xbf16, #tpu.memory_space<vmem>>, vector<256x4xbf16>
    %cst_7 = arith.constant dense<0.000000e+00> : vector<16x4xf32>
    %7 = tpu.matmul %5, %6, %cst_7 {dimension_numbers = #tpu.dot_dimension_numbers<[1], [0], [0], [1], [0, 0, 1, 1], [], []>} : vector<16x256xbf16>, vector<256x4xbf16>, vector<16x4xf32> -> vector<16x4xf32>
    %c0_8 = arith.constant 0 : index
    %c0_9 = arith.constant 0 : index
    %8 = vector.load %arg5[%c0_8, %c0_9] : memref<16x4xf32, #tpu.memory_space<vmem>>, vector<16x4xf32>
    tpu.vector_store %arg5[%c0_8, %c0_9], %7 {strides = array<i32>} : memref<16x4xf32, #tpu.memory_space<vmem>>, vector<16x4xf32>,
    return
  }
  func.func @transform_0(%arg0: i32) -> (i32, i32) {
    %c0_i32 = arith.constant 0 : i32
    %c0_i32_0 = arith.constant 0 : i32
    return %arg0, %c0_i32 : i32, i32
  }
  func.func @transform_1(%arg0: i32) -> (i32, i32) {
    %c0_i32 = arith.constant 0 : i32
    %c0_i32_0 = arith.constant 0 : i32
    %c0_i32_1 = arith.constant 0 : i32
    return %c0_i32, %c0_i32_0 : i32, i32
  }
  func.func @transform_2(%arg0: i32) -> (i32, i32) {
    %c0_i32 = arith.constant 0 : i32
    %c0_i32_0 = arith.constant 0 : i32
    %c0_i32_1 = arith.constant 0 : i32
    return %c0_i32, %c0_i32_0 : i32, i32
  }
  func.func @transform_3(%arg0: i32) -> (i32, i32) {
    %c0_i32 = arith.constant 0 : i32
    %c0_i32_0 = arith.constant 0 : i32
    return %arg0, %c0_i32 : i32, i32
  }
  func.func @transform_4(%arg0: i32) -> (i32, i32) {
    %c0_i32 = arith.constant 0 : i32
    %c0_i32_0 = arith.constant 0 : i32
    return %arg0, %c0_i32 : i32, i32
  }
}

</mosaic_0001>

<llo_original>
// kernel: tpu_custom_call.1
$region0: #{tpu_custom_call.1}
  #allocation0 [shape = 'u32[]', space=smem, size = 0x4, offset = 0x4, fixed_abs, tag = 'smem constant byte address 0x4 - core index']
  #allocation1 [shape = 'u32[72,128]{1,0:T(1,128)}', space=vmem, size = 0x9000, scoped, tag = 'internal scratch']
  %s0 = inlined_call_operand.vmem [shape: bf16[16,16], index: 0, kind: input, shape index: {}]
  %s1 = inlined_call_operand.vmem [shape: bf16[16,256], index: 1, kind: input, shape index: {}]
  %s2 = inlined_call_operand.vmem [shape: bf16[256,4], index: 2, kind: input, shape index: {}]
  %s3 = inlined_call_operand.hbm [shape: bf16[16,256], index: 3, kind: output, shape index: {0}]
  %s4 = inlined_call_operand.vmem [shape: f32[16,4], index: 4, kind: output, shape index: {1}]
  %5 = xla_tuple %s3, %s4
  %s6 = sld [smem:[#allocation0]]
  $region30: #{tpu_custom_call.1} parent=0
    _
  %s8 = ssub.s32 1, %s6
  %s9 = scalar_select 0, %s8, %s6
  $region1: #{tpu_custom_call.1} parent=0
    #allocation2 [shape = 'u8[8192]{0}', space=vmem, size = 0x2000, scoped, tag = 'output window, operand 0, single buffered']
    #allocation3 [shape = 's32[1]{0}', space=sflag, size = 0x4, scoped, tag = 'scoped memory for tpu_custom_call.1']
    %10 = vsyncpa [#allocation3], 0
    // Predicated region
    $region2: #{tpu_custom_call.1} parent=1 // pred_check
      _
    $region3: #{tpu_custom_call.1} parent=1 // pred_check_branch
      %12 = sbr.rel (0) target = $region5
    $region4: #{tpu_custom_call.1} parent=1 // pred_region
      _
    $region5: #{tpu_custom_call.1} parent=1 // pred_fallthru
      _
    // Predicated region
    $region6: #{tpu_custom_call.1} parent=1 // pred_check
      _
    $region7: #{tpu_custom_call.1} parent=1 // pred_check_branch
      %14 = sbr.rel (0) target = $region9
    $region8: #{tpu_custom_call.1} parent=1 // pred_region
      _
    $region9: #{tpu_custom_call.1} parent=1 // pred_fallthru
      _
    // Predicated region
    $region10: #{tpu_custom_call.1} parent=1 // pred_check
      _
    $region11: #{tpu_custom_call.1} parent=1 // pred_check_branch
      %16 = sbr.rel (0) target = $region13
    $region12: #{tpu_custom_call.1} parent=1 // pred_region
      _
    $region13: #{tpu_custom_call.1} parent=1 // pred_fallthru
      _
    %v18 = vld [vmem:[%s0] sm:$0xf]
    %v19 = vld [vmem:[%s0 + $0x4] sm:$0xf]
    %v20 = vld [vmem:[%s1] sm:$0xff]
    %v21 = vld [vmem:[%s1 + $0x8] sm:$0xff]
    %v24 = vunpack.c.l.b16 %v18
    %v25 = vunpack.c.l.b16 %v19
    %v26 = vpack.c.b16 %v25, %v24
    %v29 = vunpack.c.l.b16 %v20
    %v30 = vunpack.c.h.b16 %v20
    %v31 = vunpack.c.l.b16 %v21
    %v32 = vunpack.c.h.b16 %v21
    %v33 = vpack.c.b16 %v31, %v29
    %v34 = vpack.c.b16 %v32, %v30
    %vm37 = vcmask 130048
    %v39 = vsel %vm37, %v26, 0
    %41 = vmatpush.bf16.msra.mxu0 0
    %42 = vmatpush.bf16.msra.mxu0 0
    %43 = vmatpush.bf16.msra.mxu0 0
    %44 = vmatpush.bf16.msra.mxu0 0
    %45 = vmatpush.bf16.msra.mxu0 0
    %46 = vmatpush.bf16.msra.mxu0 0
    %47 = vmatpush.bf16.msra.mxu0 0
    %48 = vmatpush.bf16.msra.mxu0 %v33
    %49 = vmatmul.bf16.gmra.mxu0 %v39
    %v50 = vpop.f32.mrf.mxu0
    %v51 = vadd.f32 0.0, %v50
    %v52 = vpop.f32.mrf.mxu0
    %v53 = vadd.f32 0.0, %v52
    %54 = vdwg.mxu0
    %55 = vmatpush.bf16.msra.mxu0 0
    %56 = vmatpush.bf16.msra.mxu0 0
    %57 = vmatpush.bf16.msra.mxu0 0
    %58 = vmatpush.bf16.msra.mxu0 0
    %59 = vmatpush.bf16.msra.mxu0 0
    %60 = vmatpush.bf16.msra.mxu0 0
    %61 = vmatpush.bf16.msra.mxu0 0
    %62 = vmatpush.bf16.msra.mxu0 %v34
    %63 = vmatmul.bf16.gmra.mxu0 %v39
    %v64 = vpop.f32.mrf.mxu0
    %v65 = vadd.f32 0.0, %v64
    %v66 = vpop.f32.mrf.mxu0
    %v67 = vadd.f32 0.0, %v66
    %68 = vdwg.mxu0
    %v69 = vpack.c.bf16 %v65, %v51
    %v70 = vpack.c.bf16 %v67, %v53
    %71 = vst [vmem:[#allocation2] sm:$0xff] %v69
    %72 = vst [vmem:[#allocation2 + $0x8] sm:$0xff] %v70
    %v73 = vld [vmem:[%s2] sm:$0xf]
    %v74 = vld [vmem:[%s2 + $0x4] sm:$0xf]
    %v75 = vld [vmem:[%s2 + $0x8] sm:$0xf]
    %v76 = vld [vmem:[%s2 + $0xc] sm:$0xf]
    %v77 = vld [vmem:[%s2 + $0x10] sm:$0xf]
    %v78 = vld [vmem:[%s2 + $0x14] sm:$0xf]
    %v79 = vld [vmem:[%s2 + $0x18] sm:$0xf]
    %v80 = vld [vmem:[%s2 + $0x1c] sm:$0xf]
    %v81 = vld [vmem:[%s2 + $0x20] sm:$0xf]
    %v82 = vld [vmem:[%s2 + $0x24] sm:$0xf]
    %v83 = vld [vmem:[%s2 + $0x28] sm:$0xf]
    %v84 = vld [vmem:[%s2 + $0x2c] sm:$0xf]
    %v85 = vld [vmem:[%s2 + $0x30] sm:$0xf]
    %v86 = vld [vmem:[%s2 + $0x34] sm:$0xf]
    %v87 = vld [vmem:[%s2 + $0x38] sm:$0xf]
    %v88 = vld [vmem:[%s2 + $0x3c] sm:$0xf]
    %v89 = vld [vmem:[%s2 + $0x40] sm:$0xf]
    %v90 = vld [vmem:[%s2 + $0x44] sm:$0xf]
    %v91 = vld [vmem:[%s2 + $0x48] sm:$0xf]
    %v92 = vld [vmem:[%s2 + $0x4c] sm:$0xf]
    %v93 = vld [vmem:[%s2 + $0x50] sm:$0xf]
    %v94 = vld [vmem:[%s2 + $0x54] sm:$0xf]
    %v95 = vld [vmem:[%s2 + $0x58] sm:$0xf]
    %v96 = vld [vmem:[%s2 + $0x5c] sm:$0xf]
    %v97 = vld [vmem:[%s2 + $0x60] sm:$0xf]
    %v98 = vld [vmem:[%s2 + $0x64] sm:$0xf]
    %v99 = vld [vmem:[%s2 + $0x68] sm:$0xf]
    %v100 = vld [vmem:[%s2 + $0x6c] sm:$0xf]
    %v101 = vld [vmem:[%s2 + $0x70] sm:$0xf]
    %v102 = vld [vmem:[%s2 + $0x74] sm:$0xf]
    %v103 = vld [vmem:[%s2 + $0x78] sm:$0xf]
    %v104 = vld [vmem:[%s2 + $0x7c] sm:$0xf]
    %v107 = vunpack.c.l.b16 %v69
    %v108 = vunpack.c.h.b16 %v69
    %v109 = vunpack.c.l.b16 %v70
    %v110 = vunpack.c.h.b16 %v70
    %v111 = vpack.c.b16 %v109, %v107
    %v112 = vpack.c.b16 %v110, %v108
    %v147 = vunpack.c.l.b16 %v73
    %v148 = vunpack.c.l.b16 %v74
    %v149 = vunpack.c.l.b16 %v75
    %v150 = vunpack.c.l.b16 %v76
    %v151 = vunpack.c.l.b16 %v77
    %v152 = vunpack.c.l.b16 %v78
    %v153 = vunpack.c.l.b16 %v79
    %v154 = vunpack.c.l.b16 %v80
    %v155 = vunpack.c.l.b16 %v81
    %v156 = vunpack.c.l.b16 %v82
    %v157 = vunpack.c.l.b16 %v83
    %v158 = vunpack.c.l.b16 %v84
    %v159 = vunpack.c.l.b16 %v85
    %v160 = vunpack.c.l.b16 %v86
    %v161 = vunpack.c.l.b16 %v87
    %v162 = vunpack.c.l.b16 %v88
    %v163 = vunpack.c.l.b16 %v89
    %v164 = vunpack.c.l.b16 %v90
    %v165 = vunpack.c.l.b16 %v91
    %v166 = vunpack.c.l.b16 %v92
    %v167 = vunpack.c.l.b16 %v93
    %v168 = vunpack.c.l.b16 %v94
    %v169 = vunpack.c.l.b16 %v95
    %v170 = vunpack.c.l.b16 %v96
    %v171 = vunpack.c.l.b16 %v97
    %v172 = vunpack.c.l.b16 %v98
    %v173 = vunpack.c.l.b16 %v99
    %v174 = vunpack.c.l.b16 %v100
    %v175 = vunpack.c.l.b16 %v101
    %v176 = vunpack.c.l.b16 %v102
    %v177 = vunpack.c.l.b16 %v103
    %v178 = vunpack.c.l.b16 %v104
    %v179 = vpack.c.b16 %v148, %v147
    %v180 = vpack.c.b16 %v150, %v149
    %v181 = vpack.c.b16 %v152, %v151
    %v182 = vpack.c.b16 %v154, %v153
    %v183 = vpack.c.b16 %v156, %v155
    %v184 = vpack.c.b16 %v158, %v157
    %v185 = vpack.c.b16 %v160, %v159
    %v186 = vpack.c.b16 %v162, %v161
    %v187 = vpack.c.b16 %v164, %v163
    %v188 = vpack.c.b16 %v166, %v165
    %v189 = vpack.c.b16 %v168, %v167
    %v190 = vpack.c.b16 %v170, %v169
    %v191 = vpack.c.b16 %v172, %v171
    %v192 = vpack.c.b16 %v174, %v173
    %v193 = vpack.c.b16 %v176, %v175
    %v194 = vpack.c.b16 %v178, %v177
    %211 = vmatpush.bf16.msra.mxu0 %v186
    %212 = vmatpush.bf16.msra.mxu0 %v185
    %213 = vmatpush.bf16.msra.mxu0 %v184
    %214 = vmatpush.bf16.msra.mxu0 %v183
    %215 = vmatpush.bf16.msra.mxu0 %v182
    %216 = vmatpush.bf16.msra.mxu0 %v181
    %217 = vmatpush.bf16.msra.mxu0 %v180
    %218 = vmatpush.bf16.msra.mxu0 %v179
    %219 = vmatmul.bf16.gmra.mxu0 %v111
    %v220 = vpop.f32.mrf.mxu0
    %v221 = vadd.f32 0.0, %v220
    %v222 = vpop.f32.mrf.mxu0
    %v223 = vadd.f32 0.0, %v222
    %224 = vdwg.mxu0
    %225 = vmatpush.bf16.msra.mxu0 %v194
    %226 = vmatpush.bf16.msra.mxu0 %v193
    %227 = vmatpush.bf16.msra.mxu0 %v192
    %228 = vmatpush.bf16.msra.mxu0 %v191
    %229 = vmatpush.bf16.msra.mxu0 %v190
    %230 = vmatpush.bf16.msra.mxu0 %v189
    %231 = vmatpush.bf16.msra.mxu0 %v188
    %232 = vmatpush.bf16.msra.mxu0 %v187
    %233 = vmatmul.bf16.gmra.mxu0 %v112
    %v234 = vpop.f32.mrf.mxu0
    %v235 = vadd.f32 %v221, %v234
    %v236 = vpop.f32.mrf.mxu0
    %v237 = vadd.f32 %v223, %v236
    %238 = vdwg.mxu0
    %vm239 = vcmask 31744
    %240 = vst.msk [vmem:[%s4] sm:$0xff] %vm239, %v235
    %241 = vst.msk [vmem:[%s4 + $0x8] sm:$0xff] %vm239, %v237
    // Predicated region
    $region14: #{tpu_custom_call.1} parent=1 // pred_check
      _
    $region15: #{tpu_custom_call.1} parent=1 // pred_check_branch
      %243 = sbr.rel (0) target = $region17
    $region16: #{tpu_custom_call.1} parent=1 // pred_region
      %245 = vsyncadd [#allocation3], 0
      %s246 = sshll.u32 [#allocation2], 4
      %s247 = int_to_ptr.vmem [resolvable:$true] %s246
      %s248 = sshll.u32 %s3, 4
      %s249 = int_to_ptr.hbm [resolvable:$true] %s248
      %254 = dma.vmem_to_hbm [thread:$0]  %s247, 256, %s249, [#allocation3], 128, 128, 8
    $region17: #{tpu_custom_call.1} parent=1 // pred_fallthru
      _
    // Predicated region
    $region18: #{tpu_custom_call.1} parent=1 // pred_check
      _
    $region19: #{tpu_custom_call.1} parent=1 // pred_check_branch
      %256 = sbr.rel (0) target = $region21
    $region20: #{tpu_custom_call.1} parent=1 // pred_region
      _
    $region21: #{tpu_custom_call.1} parent=1 // pred_fallthru
      _
    // Predicated region
    $region22: #{tpu_custom_call.1} parent=1 // pred_check
      _
    $region23: #{tpu_custom_call.1} parent=1 // pred_check_branch
      %258 = sbr.rel (0) target = $region25
    $region24: #{tpu_custom_call.1} parent=1 // pred_region
      %260 = dma.done [#allocation3], 256
    $region25: #{tpu_custom_call.1} parent=1 // pred_fallthru
      _
    // Predicated region
    $region26: #{tpu_custom_call.1} parent=1 // pred_check
      _
    $region27: #{tpu_custom_call.1} parent=1 // pred_check_branch
      %262 = sbr.rel (0) target = $region29
    $region28: #{tpu_custom_call.1} parent=1 // pred_region
      _
    $region29: #{tpu_custom_call.1} parent=1 // pred_fallthru
      _
    %263 = vsyncpa [#allocation3], 1

</llo_original>
